<compile_context>
chip_gen: v7x
topology: tpu7x:2x2x1
jax: 0.10.0
libtpu: 0.0.40
codegen_flags: <defaults>
</compile_context>

<pallas_src>
import functools
import math

import jax
import jax.numpy as jnp
from jax import lax
from jax.experimental import pallas as pl
from jax.experimental.pallas import tpu as pltpu


_H1, _H2, _OUT = 64, 32, 2
_CHUNK = 256  # rows per in-kernel sub-chunk (keeps the live f32 set in vregs)


def _layers(x, w1, b1, w2, b2, w3, b3):
    """layer1+ReLU, layer2+ReLU, layer3 — MXU matmuls with f32 accumulation."""
    h1 = jnp.maximum(jnp.dot(x, w1, preferred_element_type=jnp.float32) + b1, 0.0)
    h1 = h1.astype(w2.dtype)
    h2 = jnp.maximum(jnp.dot(h1, w2, preferred_element_type=jnp.float32) + b2, 0.0)
    h2 = h2.astype(w3.dtype)
    return jnp.dot(h2, w3, preferred_element_type=jnp.float32) + b3


def _mlp_kernel(x_ref, w1_ref, b1_ref, w2_ref, b2_ref, w3_ref, b3_ref, o_ref):
    # Weights/biases are resident in VMEM (constant index maps); load them once per step.
    w1 = w1_ref[...]
    b1 = b1_ref[...].astype(jnp.float32)
    w2 = w2_ref[...]
    b2 = b2_ref[...].astype(jnp.float32)
    w3 = w3_ref[...]
    b3 = b3_ref[...].astype(jnp.float32)

    tb = x_ref.shape[0]
    if tb <= _CHUNK or tb % _CHUNK != 0:
        # Small / full-extent single block: process the whole tile at once.
        out = _layers(x_ref[...], w1, b1, w2, b2, w3, b3)
        o_ref[...] = out.astype(o_ref.dtype)
    else:
        # Large tile: sub-chunk so x/h1/h2/out of one chunk fit in the vreg file
        # (no spill ld/st contending for the load/store slots).
        n_chunks = tb // _CHUNK

        def body(c, carry):
            r = pl.multiple_of(c * _CHUNK, _CHUNK)
            x = x_ref[pl.ds(r, _CHUNK), :]
            out = _layers(x, w1, b1, w2, b2, w3, b3)
            o_ref[pl.ds(r, _CHUNK), :] = out.astype(o_ref.dtype)
            return carry

        lax.fori_loop(0, n_chunks, body, 0, unroll=True)


def _round_up(x, m):
    return ((x + m - 1) // m) * m


def _choose_batch_tile(B, D, block_b):
    """Pick the per-grid-step batch tile.

    Big tiles amortize the ~0.35 us per-grid-step overhead; the cap keeps the
    double-buffered x tile + resident weights + temps under ~40 MiB so the same
    choice is safe on v7x (64 MiB VMEM) and trivially safe on v5e/v6e (128 MiB).
    """
    if B <= 512:
        return B  # single full-extent block (always layout-legal, grid of 1)

    budget = 40 << 20
    resident = D * _H1 * 4 + _H1 * _H2 * 4 + _H2 * _OUT * 4 + (_H1 + _H2 + _OUT) * 4
    per_row = 2 * D * 4 + 2 * _OUT * 4 + (_H1 + _H2) * 4  # x/out double-buffers + temps
    cap = max(_CHUNK, ((budget - resident) // per_row) // _CHUNK * _CHUNK)

    # Aim for >= 2 grid steps of roughly equal size (v7x megacore balance) while
    # keeping each step at most block_b rows.
    n_tiles = max(2, pl.cdiv(B, block_b))
    tb = _round_up(pl.cdiv(B, n_tiles), _CHUNK)
    return max(_CHUNK, min(tb, block_b, cap))


@functools.partial(jax.jit, static_argnames=("block_b", "stream_bf16"))
def emission_predictor(x, w1, b1, w2, b2, w3, b3, *, block_b=4096, stream_bf16=False):
    """Pallas forward pass of EmissionPredictor.

    x:  (B, D) float32
    w1: (D, 64), b1: (1, 64)
    w2: (64, 32), b2: (1, 32)
    w3: (32, 2),  b3: (1, 2)
    returns (B, 2) float32
    """
    B, D = x.shape
    TB = _choose_batch_tile(B, D, block_b)
    grid = (pl.cdiv(B, TB),)  # ragged last block handled by Pallas boundary masking (no pad copy)

    if stream_bf16:
        # Optional perf mode: halve the x HBM stream and feed the MXU bf16 inputs;
        # accumulation, bias, ReLU and the output stay f32.
        x = x.astype(jnp.bfloat16)
        w1 = w1.astype(jnp.bfloat16)
        w2 = w2.astype(jnp.bfloat16)
        w3 = w3.astype(jnp.bfloat16)

    # Weights/biases: constant block index -> fetched once, resident in VMEM for all grid steps.
    const2d = lambda shape: pl.BlockSpec(shape, lambda i: (0, 0))

    itemsize = 2 if stream_bf16 else 4
    flops = 2 * B * (D * _H1 + _H1 * _H2 + _H2 * _OUT)
    bytes_accessed = (
        B * D * itemsize + B * _OUT * 4
        + (D * _H1 + _H1 * _H2 + _H2 * _OUT) * itemsize
        + (_H1 + _H2 + _OUT) * 4
    )

    out = pl.pallas_call(
        _mlp_kernel,
        out_shape=jax.ShapeDtypeStruct((B, _OUT), jnp.float32),
        grid=grid,
        in_specs=[
            pl.BlockSpec((TB, D), lambda i: (i, 0)),   # x: batch-tiled, double-buffered
            const2d((D, _H1)), const2d((1, _H1)),
            const2d((_H1, _H2)), const2d((1, _H2)),
            const2d((_H2, _OUT)), const2d((1, _OUT)),
        ],
        out_specs=pl.BlockSpec((TB, _OUT), lambda i: (i, 0)),
        compiler_params=pltpu.CompilerParams(
            # Batch axis is embarrassingly parallel -> v7x megacore sharding; no-op on v5e/v6e.
            dimension_semantics=("parallel",),
            # TB selection caps the real footprint at ~40 MiB; this just lifts the default
            # scoped limit (16/32 MiB on v5e/v6e) out of the way.
            vmem_limit_bytes=64 << 20,
        ),
        cost_estimate=pl.CostEstimate(
            flops=flops, transcendentals=0, bytes_accessed=bytes_accessed),
    )(x, w1, b1, w2, b2, w3, b3)
    return out


def init_params(key, input_dim):
    """Deterministic PyTorch-style init: U(-1/sqrt(fan_in), 1/sqrt(fan_in))."""
    dims = [(input_dim, 64), (64, 32), (32, 2)]
    params = []
    for (fan_in, fan_out) in dims:
        key, kw, kb = jax.random.split(key, 3)
        bound = 1.0 / math.sqrt(fan_in)
        w = jax.random.uniform(kw, (fan_in, fan_out), jnp.float32, -bound, bound)
        b = jax.random.uniform(kb, (1, fan_out), jnp.float32, -bound, bound)
        params += [w, b]
    return params


def reference_forward(x, w1, b1, w2, b2, w3, b3):
    h1 = jnp.maximum(x @ w1 + b1, 0.0)
    h2 = jnp.maximum(h1 @ w2 + b2, 0.0)
    return h2 @ w3 + b3


if __name__ == "__main__":
    key = jax.random.PRNGKey(0)
    key, kx, kx2 = jax.random.split(key, 3)

    batch, input_dim = 8, 16
    x = jax.random.normal(kx, (batch, input_dim), jnp.float32)
    w1, b1, w2, b2, w3, b3 = init_params(key, input_dim)

    # Small-batch path (single full-extent block).
    out = jax.block_until_ready(emission_predictor(x, w1, b1, w2, b2, w3, b3))
    ref = reference_forward(x, w1, b1, w2, b2, w3, b3)
    assert out.shape == (batch, 2), out.shape
    assert jnp.allclose(out, ref, atol=1e-5, rtol=1e-5), "mismatch vs JAX reference (small batch)"

    # Tiled + ragged path: grid > 1, boundary-block masking instead of a host-side pad copy.
    big_batch = 1030
    x_big = jax.random.normal(kx2, (big_batch, input_dim), jnp.float32)
    out_big = jax.block_until_ready(emission_predictor(x_big, w1, b1, w2, b2, w3, b3))
    ref_big = reference_forward(x_big, w1, b1, w2, b2, w3, b3)
    assert out_big.shape == (big_batch, 2), out_big.shape
    assert jnp.allclose(out_big, ref_big, atol=1e-5, rtol=1e-5), "mismatch vs JAX reference (tiled batch)"

    # Optional bf16-stream mode (halved HBM traffic, f32 accumulation) — loose tolerance.
    out_bf16 = jax.block_until_ready(
        emission_predictor(x_big, w1, b1, w2, b2, w3, b3, stream_bf16=True))
    assert out_bf16.shape == (big_batch, 2), out_bf16.shape
    assert jnp.allclose(out_bf16, ref_big, atol=1e-1, rtol=1e-1), "mismatch vs JAX reference (bf16 stream)"

    print("KERNEL_OK")
</pallas_src>

<mosaic_0001>
module attributes {stable_mosaic.version = 11 : i64} {
  func.func @_mlp_kernel(%arg0: i32, %arg1: memref<8x16xf32, #tpu.memory_space<vmem>>, %arg2: memref<16x64xf32, #tpu.memory_space<vmem>>, %arg3: memref<1x64xf32, #tpu.memory_space<vmem>>, %arg4: memref<64x32xf32, #tpu.memory_space<vmem>>, %arg5: memref<1x32xf32, #tpu.memory_space<vmem>>, %arg6: memref<32x2xf32, #tpu.memory_space<vmem>>, %arg7: memref<1x2xf32, #tpu.memory_space<vmem>>, %arg8: memref<8x2xf32, #tpu.memory_space<vmem>>) attributes {dimension_semantics = [#tpu.dimension_semantics<parallel>], iteration_bounds = array<i64: 1>, scalar_prefetch = 0 : i64, scratch_operands = 0 : i64, tpu.core_type = #tpu.core_type<tc>, window_params = [{transform_indices = @transform_0, window_bounds = array<i64: 8, 16>}, {pipeline_mode = #tpu.pipeline_mode<synchronous>, transform_indices = @transform_1, window_bounds = array<i64: 16, 64>}, {pipeline_mode = #tpu.pipeline_mode<synchronous>, transform_indices = @transform_2, window_bounds = array<i64: 1, 64>}, {pipeline_mode = #tpu.pipeline_mode<synchronous>, transform_indices = @transform_3, window_bounds = array<i64: 64, 32>}, {pipeline_mode = #tpu.pipeline_mode<synchronous>, transform_indices = @transform_4, window_bounds = array<i64: 1, 32>}, {pipeline_mode = #tpu.pipeline_mode<synchronous>, transform_indices = @transform_5, window_bounds = array<i64: 32, 2>}, {pipeline_mode = #tpu.pipeline_mode<synchronous>, transform_indices = @transform_6, window_bounds = array<i64: 1, 2>}, {transform_indices = @transform_7, window_bounds = array<i64: 8, 2>}]} {
    %c0 = arith.constant 0 : index
    %c0_0 = arith.constant 0 : index
    %0 = vector.load %arg2[%c0, %c0_0] : memref<16x64xf32, #tpu.memory_space<vmem>>, vector<16x64xf32>
    %c0_1 = arith.constant 0 : index
    %c0_2 = arith.constant 0 : index
    %1 = vector.load %arg3[%c0_1, %c0_2] : memref<1x64xf32, #tpu.memory_space<vmem>>, vector<1x64xf32>
    %c0_3 = arith.constant 0 : index
    %c0_4 = arith.constant 0 : index
    %2 = vector.load %arg4[%c0_3, %c0_4] : memref<64x32xf32, #tpu.memory_space<vmem>>, vector<64x32xf32>
    %c0_5 = arith.constant 0 : index
    %c0_6 = arith.constant 0 : index
    %3 = vector.load %arg5[%c0_5, %c0_6] : memref<1x32xf32, #tpu.memory_space<vmem>>, vector<1x32xf32>
    %c0_7 = arith.constant 0 : index
    %c0_8 = arith.constant 0 : index
    %4 = vector.load %arg6[%c0_7, %c0_8] : memref<32x2xf32, #tpu.memory_space<vmem>>, vector<32x2xf32>
    %c0_9 = arith.constant 0 : index
    %c0_10 = arith.constant 0 : index
    %5 = vector.load %arg7[%c0_9, %c0_10] : memref<1x2xf32, #tpu.memory_space<vmem>>, vector<1x2xf32>
    %c0_11 = arith.constant 0 : index
    %c0_12 = arith.constant 0 : index
    %6 = vector.load %arg1[%c0_11, %c0_12] : memref<8x16xf32, #tpu.memory_space<vmem>>, vector<8x16xf32>
    %cst = arith.constant dense<0.000000e+00> : vector<8x64xf32>
    %7 = tpu.matmul %6, %0, %cst {dimension_numbers = #tpu.dot_dimension_numbers<[1], [0], [0], [1], [0, 0, 1, 1], [], []>} : vector<8x16xf32>, vector<16x64xf32>, vector<8x64xf32> -> vector<8x64xf32>
    %8 = vector.broadcast %1 : vector<1x64xf32> to vector<8x64xf32>
    %9 = arith.addf %7, %8 : vector<8x64xf32>
    %cst_13 = arith.constant 0.000000e+00 : f32
    %10 = vector.broadcast %cst_13 : f32 to vector<8x64xf32>
    %11 = arith.maximumf %9, %10 : vector<8x64xf32>
    %cst_14 = arith.constant dense<0.000000e+00> : vector<8x32xf32>
    %12 = tpu.matmul %11, %2, %cst_14 {dimension_numbers = #tpu.dot_dimension_numbers<[1], [0], [0], [1], [0, 0, 1, 1], [], []>} : vector<8x64xf32>, vector<64x32xf32>, vector<8x32xf32> -> vector<8x32xf32>
    %13 = vector.broadcast %3 : vector<1x32xf32> to vector<8x32xf32>
    %14 = arith.addf %12, %13 : vector<8x32xf32>
    %cst_15 = arith.constant 0.000000e+00 : f32
    %15 = vector.broadcast %cst_15 : f32 to vector<8x32xf32>
    %16 = arith.maximumf %14, %15 : vector<8x32xf32>
    %cst_16 = arith.constant dense<0.000000e+00> : vector<8x2xf32>
    %17 = tpu.matmul %16, %4, %cst_16 {dimension_numbers = #tpu.dot_dimension_numbers<[1], [0], [0], [1], [0, 0, 1, 1], [], []>} : vector<8x32xf32>, vector<32x2xf32>, vector<8x2xf32> -> vector<8x2xf32>
    %18 = vector.broadcast %5 : vector<1x2xf32> to vector<8x2xf32>
    %19 = arith.addf %17, %18 : vector<8x2xf32>
    %c0_17 = arith.constant 0 : index
    %c0_18 = arith.constant 0 : index
    %20 = vector.load %arg8[%c0_17, %c0_18] : memref<8x2xf32, #tpu.memory_space<vmem>>, vector<8x2xf32>
    tpu.vector_store %arg8[%c0_17, %c0_18], %19 {strides = array<i32>} : memref<8x2xf32, #tpu.memory_space<vmem>>, vector<8x2xf32>,
    return
  }
  func.func @transform_0(%arg0: i32) -> (i32, i32) {
    %c0_i32 = arith.constant 0 : i32
    %c0_i32_0 = arith.constant 0 : i32
    return %arg0, %c0_i32 : i32, i32
  }
  func.func @transform_1(%arg0: i32) -> (i32, i32) {
    %c0_i32 = arith.constant 0 : i32
    %c0_i32_0 = arith.constant 0 : i32
    %c0_i32_1 = arith.constant 0 : i32
    return %c0_i32, %c0_i32_0 : i32, i32
  }
  func.func @transform_2(%arg0: i32) -> (i32, i32) {
    %c0_i32 = arith.constant 0 : i32
    %c0_i32_0 = arith.constant 0 : i32
    %c0_i32_1 = arith.constant 0 : i32
    return %c0_i32, %c0_i32_0 : i32, i32
  }
  func.func @transform_3(%arg0: i32) -> (i32, i32) {
    %c0_i32 = arith.constant 0 : i32
    %c0_i32_0 = arith.constant 0 : i32
    %c0_i32_1 = arith.constant 0 : i32
    return %c0_i32, %c0_i32_0 : i32, i32
  }
  func.func @transform_4(%arg0: i32) -> (i32, i32) {
    %c0_i32 = arith.constant 0 : i32
    %c0_i32_0 = arith.constant 0 : i32
    %c0_i32_1 = arith.constant 0 : i32
    return %c0_i32, %c0_i32_0 : i32, i32
  }
  func.func @transform_5(%arg0: i32) -> (i32, i32) {
    %c0_i32 = arith.constant 0 : i32
    %c0_i32_0 = arith.constant 0 : i32
    %c0_i32_1 = arith.constant 0 : i32
    return %c0_i32, %c0_i32_0 : i32, i32
  }
  func.func @transform_6(%arg0: i32) -> (i32, i32) {
    %c0_i32 = arith.constant 0 : i32
    %c0_i32_0 = arith.constant 0 : i32
    %c0_i32_1 = arith.constant 0 : i32
    return %c0_i32, %c0_i32_0 : i32, i32
  }
  func.func @transform_7(%arg0: i32) -> (i32, i32) {
    %c0_i32 = arith.constant 0 : i32
    %c0_i32_0 = arith.constant 0 : i32
    return %arg0, %c0_i32 : i32, i32
  }
}

</mosaic_0001>

<llo_original>
// kernel: emission_predictor.1
$region0: #{emission_predictor.1}
  #allocation0 [shape = 'u32[]', space=smem, size = 0x4, offset = 0x4, fixed_abs, tag = 'smem constant byte address 0x4 - core index']
  #allocation1 [shape = 'u32[144,128]{1,0:T(1,128)}', space=vmem, size = 0x12000, scoped, tag = 'internal scratch']
  %s0 = inlined_call_operand.hbm [shape: f32[8,16], index: 0, kind: input, shape index: {}]
  %s1 = inlined_call_operand.hbm [shape: f32[16,64], index: 1, kind: input, shape index: {}]
  %s2 = inlined_call_operand.hbm [shape: f32[1,64], index: 2, kind: input, shape index: {}]
  %s3 = inlined_call_operand.hbm [shape: f32[64,32], index: 3, kind: input, shape index: {}]
  %s4 = inlined_call_operand.hbm [shape: f32[1,32], index: 4, kind: input, shape index: {}]
  %s5 = inlined_call_operand.hbm [shape: f32[32,2], index: 5, kind: input, shape index: {}]
  %s6 = inlined_call_operand.hbm [shape: f32[1,2], index: 6, kind: input, shape index: {}]
  %s7 = inlined_call_operand.hbm [shape: f32[8,2], index: 7, kind: output, shape index: {}]
  %s8 = sld [smem:[#allocation0]]
  $region66: #{emission_predictor.1} parent=0
    _
  %s10 = ssub.s32 1, %s8
  %s11 = scalar_select 0, %s10, %s8
  $region1: #{emission_predictor.1} parent=0
    #allocation2 [shape = 'u8[4096]{0}', space=vmem, size = 0x1000, scoped, tag = 'input window, operand 0, single buffered']
    #allocation3 [shape = 's32[1]{0}', space=sflag, size = 0x4, scoped, tag = 'scoped memory for emission_predictor.1']
    #allocation4 [shape = 's32[1]{0}', space=sflag, size = 0x4, scoped, tag = 'scoped memory for emission_predictor.1']
    #allocation5 [shape = 'u8[8192]{0}', space=vmem, size = 0x2000, scoped, tag = 'input window, operand 1, single buffered']
    #allocation6 [shape = 's32[1]{0}', space=sflag, size = 0x4, scoped, tag = 'scoped memory for emission_predictor.1']
    #allocation7 [shape = 'u8[512]{0}', space=vmem, size = 0x400, scoped, tag = 'input window, operand 2, single buffered']
    #allocation8 [shape = 'u8[32768]{0}', space=vmem, size = 0x8000, scoped, tag = 'input window, operand 3, single buffered']
    #allocation9 [shape = 's32[1]{0}', space=sflag, size = 0x4, scoped, tag = 'scoped memory for emission_predictor.1']
    #allocation10 [shape = 'u8[512]{0}', space=vmem, size = 0x400, scoped, tag = 'input window, operand 4, single buffered']
    #allocation11 [shape = 'u8[16384]{0}', space=vmem, size = 0x4000, scoped, tag = 'input window, operand 5, single buffered']
    #allocation12 [shape = 's32[1]{0}', space=sflag, size = 0x4, scoped, tag = 'scoped memory for emission_predictor.1']
    #allocation13 [shape = 'u8[512]{0}', space=vmem, size = 0x400, scoped, tag = 'input window, operand 6, single buffered']
    #allocation14 [shape = 'u8[4096]{0}', space=vmem, size = 0x1000, scoped, tag = 'output window, operand 0, single buffered']
    %12 = vsyncpa [#allocation3], 0
    %13 = vsyncpa [#allocation6], 0
    %14 = vsyncpa [#allocation9], 0
    %15 = vsyncpa [#allocation12], 0
    %16 = vsyncpa [#allocation4], 0
    // Predicated region
    $region2: #{emission_predictor.1} parent=1 // pred_check
      _
    $region3: #{emission_predictor.1} parent=1 // pred_check_branch
      %18 = sbr.rel (0) target = $region5
    $region4: #{emission_predictor.1} parent=1 // pred_region
      %s20 = ssub.s32 128, 128
      %21 = vsyncadd [#allocation3], %s20
      %s23 = sshll.u32 [#allocation2], 4
      %s24 = int_to_ptr.vmem [resolvable:$true] %s23
      %26 = dma.hbm_to_vmem [thread:$0]  %s0, 128, %s24, [#allocation3]
    $region5: #{emission_predictor.1} parent=1 // pred_fallthru
      _
    // Predicated region
    $region6: #{emission_predictor.1} parent=1 // pred_check
      _
    $region7: #{emission_predictor.1} parent=1 // pred_check_branch
      %28 = sbr.rel (0) target = $region9
    $region8: #{emission_predictor.1} parent=1 // pred_region
      %s30 = ssub.s32 256, 256
      %31 = vsyncadd [#allocation6], %s30
      %s32 = sshll.u32 [#allocation5], 4
      %s33 = int_to_ptr.vmem [resolvable:$true] %s32
      %38 = dma.hbm_to_vmem [thread:$0]  %s1, 256, %s33, [#allocation6], 128, 128, 8
    $region9: #{emission_predictor.1} parent=1 // pred_fallthru
      _
    // Predicated region
    $region10: #{emission_predictor.1} parent=1 // pred_check
      _
    $region11: #{emission_predictor.1} parent=1 // pred_check_branch
      %40 = sbr.rel (0) target = $region13
    $region12: #{emission_predictor.1} parent=1 // pred_region
      %s42 = ssub.s32 16, 16
      %43 = vsyncadd [#allocation6], %s42
      %s45 = sshll.u32 [#allocation7], 4
      %s46 = int_to_ptr.vmem [resolvable:$true] %s45
      %48 = dma.hbm_to_vmem [thread:$0]  %s2, 16, %s46, [#allocation6]
    $region13: #{emission_predictor.1} parent=1 // pred_fallthru
      _
    // Predicated region
    $region14: #{emission_predictor.1} parent=1 // pred_check
      _
    $region15: #{emission_predictor.1} parent=1 // pred_check_branch
      %50 = sbr.rel (0) target = $region17
    $region16: #{emission_predictor.1} parent=1 // pred_region
      %s52 = ssub.s32 1024, 1024
      %53 = vsyncadd [#allocation9], %s52
      %s54 = sshll.u32 [#allocation8], 4
      %s55 = int_to_ptr.vmem [resolvable:$true] %s54
      %60 = dma.hbm_to_vmem [thread:$0]  %s3, 1024, %s55, [#allocation9], 128, 128, 8
    $region17: #{emission_predictor.1} parent=1 // pred_fallthru
      _
    // Predicated region
    $region18: #{emission_predictor.1} parent=1 // pred_check
      _
    $region19: #{emission_predictor.1} parent=1 // pred_check_branch
      %62 = sbr.rel (0) target = $region21
    $region20: #{emission_predictor.1} parent=1 // pred_region
      %s64 = ssub.s32 16, 16
      %65 = vsyncadd [#allocation9], %s64
      %s67 = sshll.u32 [#allocation10], 4
      %s68 = int_to_ptr.vmem [resolvable:$true] %s67
      %70 = dma.hbm_to_vmem [thread:$0]  %s4, 16, %s68, [#allocation9]
    $region21: #{emission_predictor.1} parent=1 // pred_fallthru
      _
    // Predicated region
    $region22: #{emission_predictor.1} parent=1 // pred_check
      _
    $region23: #{emission_predictor.1} parent=1 // pred_check_branch
      %72 = sbr.rel (0) target = $region25
    $region24: #{emission_predictor.1} parent=1 // pred_region
      %s74 = ssub.s32 512, 512
      %75 = vsyncadd [#allocation12], %s74
      %s76 = sshll.u32 [#allocation11], 4
      %s77 = int_to_ptr.vmem [resolvable:$true] %s76
      %82 = dma.hbm_to_vmem [thread:$0]  %s5, 512, %s77, [#allocation12], 128, 128, 8
    $region25: #{emission_predictor.1} parent=1 // pred_fallthru
      _
    // Predicated region
    $region26: #{emission_predictor.1} parent=1 // pred_check
      _
    $region27: #{emission_predictor.1} parent=1 // pred_check_branch
      %84 = sbr.rel (0) target = $region29
    $region28: #{emission_predictor.1} parent=1 // pred_region
      %s86 = ssub.s32 16, 16
      %87 = vsyncadd [#allocation12], %s86
      %s89 = sshll.u32 [#allocation13], 4
      %s90 = int_to_ptr.vmem [resolvable:$true] %s89
      %92 = dma.hbm_to_vmem [thread:$0]  %s6, 16, %s90, [#allocation12]
    $region29: #{emission_predictor.1} parent=1 // pred_fallthru
      _
    // Predicated region
    $region30: #{emission_predictor.1} parent=1 // pred_check
      _
    $region31: #{emission_predictor.1} parent=1 // pred_check_branch
      %94 = sbr.rel (0) target = $region33
    $region32: #{emission_predictor.1} parent=1 // pred_region
      %95 = dma.done [#allocation3], 128
    $region33: #{emission_predictor.1} parent=1 // pred_fallthru
      _
    // Predicated region
    $region34: #{emission_predictor.1} parent=1 // pred_check
      _
    $region35: #{emission_predictor.1} parent=1 // pred_check_branch
      %97 = sbr.rel (0) target = $region37
    $region36: #{emission_predictor.1} parent=1 // pred_region
      %98 = dma.done [#allocation6], 256
    $region37: #{emission_predictor.1} parent=1 // pred_fallthru
      _
    // Predicated region
    $region38: #{emission_predictor.1} parent=1 // pred_check
      _
    $region39: #{emission_predictor.1} parent=1 // pred_check_branch
      %100 = sbr.rel (0) target = $region41
    $region40: #{emission_predictor.1} parent=1 // pred_region
      %101 = dma.done [#allocation6], 16
    $region41: #{emission_predictor.1} parent=1 // pred_fallthru
      _
    // Predicated region
    $region42: #{emission_predictor.1} parent=1 // pred_check
      _
    $region43: #{emission_predictor.1} parent=1 // pred_check_branch
      %103 = sbr.rel (0) target = $region45
    $region44: #{emission_predictor.1} parent=1 // pred_region
      %104 = dma.done [#allocation9], 1024
    $region45: #{emission_predictor.1} parent=1 // pred_fallthru
      _
    // Predicated region
    $region46: #{emission_predictor.1} parent=1 // pred_check
      _
    $region47: #{emission_predictor.1} parent=1 // pred_check_branch
      %106 = sbr.rel (0) target = $region49
    $region48: #{emission_predictor.1} parent=1 // pred_region
      %107 = dma.done [#allocation9], 16
    $region49: #{emission_predictor.1} parent=1 // pred_fallthru
      _
    // Predicated region
    $region50: #{emission_predictor.1} parent=1 // pred_check
      _
    $region51: #{emission_predictor.1} parent=1 // pred_check_branch
      %109 = sbr.rel (0) target = $region53
    $region52: #{emission_predictor.1} parent=1 // pred_region
      %110 = dma.done [#allocation12], 512
    $region53: #{emission_predictor.1} parent=1 // pred_fallthru
      _
    // Predicated region
    $region54: #{emission_predictor.1} parent=1 // pred_check
      _
    $region55: #{emission_predictor.1} parent=1 // pred_check_branch
      %112 = sbr.rel (0) target = $region57
    $region56: #{emission_predictor.1} parent=1 // pred_region
      %113 = dma.done [#allocation12], 16
    $region57: #{emission_predictor.1} parent=1 // pred_fallthru
      _
    %v114 = vld [vmem:[#allocation5] sm:$0xff]
    %v115 = vld [vmem:[#allocation5 + $0x8] sm:$0xff]
    %v116 = vld [vmem:[#allocation7] sm:$0x1]
    %v117 = vld [vmem:[#allocation8] sm:$0xff]
    %v118 = vld [vmem:[#allocation8 + $0x8] sm:$0xff]
    %v119 = vld [vmem:[#allocation8 + $0x10] sm:$0xff]
    %v120 = vld [vmem:[#allocation8 + $0x18] sm:$0xff]
    %v121 = vld [vmem:[#allocation8 + $0x20] sm:$0xff]
    %v122 = vld [vmem:[#allocation8 + $0x28] sm:$0xff]
    %v123 = vld [vmem:[#allocation8 + $0x30] sm:$0xff]
    %v124 = vld [vmem:[#allocation8 + $0x38] sm:$0xff]
    %v125 = vld [vmem:[#allocation10] sm:$0x1]
    %v126 = vld [vmem:[#allocation11] sm:$0xff]
    %v127 = vld [vmem:[#allocation11 + $0x8] sm:$0xff]
    %v128 = vld [vmem:[#allocation11 + $0x10] sm:$0xff]
    %v129 = vld [vmem:[#allocation11 + $0x18] sm:$0xff]
    %v130 = vld [vmem:[#allocation13] sm:$0x1]
    %v131 = vld [vmem:[#allocation2] sm:$0xff]
    %v133 = vlaneseq
    %v134 = vshrl.u32 %v133, 7
    %v135 = vsub.s32 0, %v134
    %v136 = vrot.slane %v116, %v135
    %vm138 = vcmask 130048
    %v140 = vsel %vm138, %v131, 0
    %142 = vmatprep.subr.mxu0 0.0
    %143 = vmatpush1.msra.mxu0 %v114
    %144 = vmatprep.subr.mxu0 0.0
    %145 = vmatpush1.msra.mxu0 %v115
    %146 = vmatprep.subr.mxu0 0.0
    %147 = vmatpush1.msra.mxu0 0.0
    %148 = vmatprep.subr.mxu0 0.0
    %149 = vmatpush1.msra.mxu0 0.0
    %150 = vmatprep.subr.mxu0 0.0
    %151 = vmatpush1.msra.mxu0 0.0
    %152 = vmatprep.subr.mxu0 0.0
    %153 = vmatpush1.msra.mxu0 0.0
    %154 = vmatprep.subr.mxu0 0.0
    %155 = vmatpush1.msra.mxu0 0.0
    %156 = vmatprep.subr.mxu0 0.0
    %157 = vmatpush1.msra.mxu0 0.0
    %158 = vmatprep.subr.mxu0 0.0
    %159 = vmatpush1.msra.mxu0 0.0
    %160 = vmatprep.subr.mxu0 0.0
    %161 = vmatpush1.msra.mxu0 0.0
    %162 = vmatprep.subr.mxu0 0.0
    %163 = vmatpush1.msra.mxu0 0.0
    %164 = vmatprep.subr.mxu0 0.0
    %165 = vmatpush1.msra.mxu0 0.0
    %166 = vmatprep.subr.mxu0 0.0
    %167 = vmatpush1.msra.mxu0 0.0
    %168 = vmatprep.subr.mxu0 0.0
    %169 = vmatpush1.msra.mxu0 0.0
    %170 = vmatprep.subr.mxu0 0.0
    %171 = vmatpush1.msra.mxu0 0.0
    %172 = vmatprep.subr.mxu0 0.0
    %173 = vmatpush1.msra.mxu0 0.0
    %174 = vmatprep.subr.mxu0 0.0
    %175 = vmatpush1.msra.mxu0 0.0
    %176 = vmatprep.subr.mxu0 0.0
    %177 = vmatpush1.msra.mxu0 0.0
    %178 = vmatprep.subr.mxu0 0.0
    %179 = vmatpush1.msra.mxu0 0.0
    %180 = vmatprep.subr.mxu0 0.0
    %181 = vmatpush1.msra.mxu0 0.0
    %182 = vmatprep.subr.mxu0 0.0
    %183 = vmatpush1.msra.mxu0 0.0
    %184 = vmatprep.subr.mxu0 0.0
    %185 = vmatpush1.msra.mxu0 0.0
    %186 = vmatprep.subr.mxu0 0.0
    %187 = vmatpush1.msra.mxu0 0.0
    %188 = vmatprep.subr.mxu0 0.0
    %189 = vmatpush1.msra.mxu0 0.0
    %190 = vmatprep.subr.mxu0 0.0
    %191 = vmatpush1.msra.mxu0 0.0
    %192 = vmatprep.subr.mxu0 0.0
    %193 = vmatpush1.msra.mxu0 0.0
    %194 = vmatprep.subr.mxu0 0.0
    %195 = vmatpush1.msra.mxu0 0.0
    %196 = vmatprep.subr.mxu0 0.0
    %197 = vmatpush1.msra.mxu0 0.0
    %198 = vmatprep.subr.mxu0 0.0
    %199 = vmatpush1.msra.mxu0 0.0
    %200 = vmatprep.subr.mxu0 0.0
    %201 = vmatpush1.msra.mxu0 0.0
    %202 = vmatprep.subr.mxu0 0.0
    %203 = vmatpush1.msra.mxu0 0.0
    %204 = vmatprep.subr.mxu0 0.0
    %205 = vmatpush1.msra.mxu0 0.0
    %206 = vmatprep.mubr.f32.mxu0 0.0
    %207 = vmatmul.mubr.f32.gmra.mrb[0].mxu0 %v140
    %v208 = vpop.f32.mrb[0].mxu0
    %v209 = vadd.f32 %v136, %v208
    %v210 = vpop.f32.mrb[0].mxu0
    %211 = vdwg.mxu0
    %v212 = vmax.f32 %v209, 0.0
    %v214 = vlaneseq
    %v215 = vshrl.u32 %v214, 7
    %v216 = vsub.s32 0, %v215
    %v217 = vrot.slane %v125, %v216
    %vm219 = vcmask 523264
    %v221 = vsel %vm219, %v212, 0
    %223 = vmatprep.subr.mxu0 0.0
    %224 = vmatpush1.msra.mxu0 %v117
    %225 = vmatprep.subr.mxu0 0.0
    %226 = vmatpush1.msra.mxu0 %v118
    %227 = vmatprep.subr.mxu0 0.0
    %228 = vmatpush1.msra.mxu0 %v119
    %229 = vmatprep.subr.mxu0 0.0
    %230 = vmatpush1.msra.mxu0 %v120
    %231 = vmatprep.subr.mxu0 0.0
    %232 = vmatpush1.msra.mxu0 %v121
    %233 = vmatprep.subr.mxu0 0.0
    %234 = vmatpush1.msra.mxu0 %v122
    %235 = vmatprep.subr.mxu0 0.0
    %236 = vmatpush1.msra.mxu0 %v123
    %237 = vmatprep.subr.mxu0 0.0
    %238 = vmatpush1.msra.mxu0 %v124
    %239 = vmatprep.subr.mxu0 0.0
    %240 = vmatpush1.msra.mxu0 0.0
    %241 = vmatprep.subr.mxu0 0.0
    %242 = vmatpush1.msra.mxu0 0.0
    %243 = vmatprep.subr.mxu0 0.0
    %244 = vmatpush1.msra.mxu0 0.0
    %245 = vmatprep.subr.mxu0 0.0
    %246 = vmatpush1.msra.mxu0 0.0
    %247 = vmatprep.subr.mxu0 0.0
    %248 = vmatpush1.msra.mxu0 0.0
    %249 = vmatprep.subr.mxu0 0.0
    %250 = vmatpush1.msra.mxu0 0.0
    %251 = vmatprep.subr.mxu0 0.0
    %252 = vmatpush1.msra.mxu0 0.0
    %253 = vmatprep.subr.mxu0 0.0
    %254 = vmatpush1.msra.mxu0 0.0
    %255 = vmatprep.subr.mxu0 0.0
    %256 = vmatpush1.msra.mxu0 0.0
    %257 = vmatprep.subr.mxu0 0.0
    %258 = vmatpush1.msra.mxu0 0.0
    %259 = vmatprep.subr.mxu0 0.0
    %260 = vmatpush1.msra.mxu0 0.0
    %261 = vmatprep.subr.mxu0 0.0
    %262 = vmatpush1.msra.mxu0 0.0
    %263 = vmatprep.subr.mxu0 0.0
    %264 = vmatpush1.msra.mxu0 0.0
    %265 = vmatprep.subr.mxu0 0.0
    %266 = vmatpush1.msra.mxu0 0.0
    %267 = vmatprep.subr.mxu0 0.0
    %268 = vmatpush1.msra.mxu0 0.0
    %269 = vmatprep.subr.mxu0 0.0
    %270 = vmatpush1.msra.mxu0 0.0
    %271 = vmatprep.subr.mxu0 0.0
    %272 = vmatpush1.msra.mxu0 0.0
    %273 = vmatprep.subr.mxu0 0.0
    %274 = vmatpush1.msra.mxu0 0.0
    %275 = vmatprep.subr.mxu0 0.0
    %276 = vmatpush1.msra.mxu0 0.0
    %277 = vmatprep.subr.mxu0 0.0
    %278 = vmatpush1.msra.mxu0 0.0
    %279 = vmatprep.subr.mxu0 0.0
    %280 = vmatpush1.msra.mxu0 0.0
    %281 = vmatprep.subr.mxu0 0.0
    %282 = vmatpush1.msra.mxu0 0.0
    %283 = vmatprep.subr.mxu0 0.0
    %284 = vmatpush1.msra.mxu0 0.0
    %285 = vmatprep.subr.mxu0 0.0
    %286 = vmatpush1.msra.mxu0 0.0
    %287 = vmatprep.mubr.f32.mxu0 0.0
    %288 = vmatmul.mubr.f32.gmra.mrb[0].mxu0 %v221
    %v289 = vpop.f32.mrb[0].mxu0
    %v290 = vadd.f32 %v217, %v289
    %v291 = vpop.f32.mrb[0].mxu0
    %292 = vdwg.mxu0
    %v293 = vmax.f32 %v290, 0.0
    %v295 = vlaneseq
    %v296 = vshrl.u32 %v295, 7
    %v297 = vsub.s32 0, %v296
    %v298 = vrot.slane %v130, %v297
    %vm300 = vcmask 261120
    %v302 = vsel %vm300, %v293, 0
    %304 = vmatprep.subr.mxu0 0.0
    %305 = vmatpush1.msra.mxu0 %v126
    %306 = vmatprep.subr.mxu0 0.0
    %307 = vmatpush1.msra.mxu0 %v127
    %308 = vmatprep.subr.mxu0 0.0
    %309 = vmatpush1.msra.mxu0 %v128
    %310 = vmatprep.subr.mxu0 0.0
    %311 = vmatpush1.msra.mxu0 %v129
    %312 = vmatprep.subr.mxu0 0.0
    %313 = vmatpush1.msra.mxu0 0.0
    %314 = vmatprep.subr.mxu0 0.0
    %315 = vmatpush1.msra.mxu0 0.0
    %316 = vmatprep.subr.mxu0 0.0
    %317 = vmatpush1.msra.mxu0 0.0
    %318 = vmatprep.subr.mxu0 0.0
    %319 = vmatpush1.msra.mxu0 0.0
    %320 = vmatprep.subr.mxu0 0.0
    %321 = vmatpush1.msra.mxu0 0.0
    %322 = vmatprep.subr.mxu0 0.0
    %323 = vmatpush1.msra.mxu0 0.0
    %324 = vmatprep.subr.mxu0 0.0
    %325 = vmatpush1.msra.mxu0 0.0
    %326 = vmatprep.subr.mxu0 0.0
    %327 = vmatpush1.msra.mxu0 0.0
    %328 = vmatprep.subr.mxu0 0.0
    %329 = vmatpush1.msra.mxu0 0.0
    %330 = vmatprep.subr.mxu0 0.0
    %331 = vmatpush1.msra.mxu0 0.0
    %332 = vmatprep.subr.mxu0 0.0
    %333 = vmatpush1.msra.mxu0 0.0
    %334 = vmatprep.subr.mxu0 0.0
    %335 = vmatpush1.msra.mxu0 0.0
    %336 = vmatprep.subr.mxu0 0.0
    %337 = vmatpush1.msra.mxu0 0.0
    %338 = vmatprep.subr.mxu0 0.0
    %339 = vmatpush1.msra.mxu0 0.0
    %340 = vmatprep.subr.mxu0 0.0
    %341 = vmatpush1.msra.mxu0 0.0
    %342 = vmatprep.subr.mxu0 0.0
    %343 = vmatpush1.msra.mxu0 0.0
    %344 = vmatprep.subr.mxu0 0.0
    %345 = vmatpush1.msra.mxu0 0.0
    %346 = vmatprep.subr.mxu0 0.0
    %347 = vmatpush1.msra.mxu0 0.0
    %348 = vmatprep.subr.mxu0 0.0
    %349 = vmatpush1.msra.mxu0 0.0
    %350 = vmatprep.subr.mxu0 0.0
    %351 = vmatpush1.msra.mxu0 0.0
    %352 = vmatprep.subr.mxu0 0.0
    %353 = vmatpush1.msra.mxu0 0.0
    %354 = vmatprep.subr.mxu0 0.0
    %355 = vmatpush1.msra.mxu0 0.0
    %356 = vmatprep.subr.mxu0 0.0
    %357 = vmatpush1.msra.mxu0 0.0
    %358 = vmatprep.subr.mxu0 0.0
    %359 = vmatpush1.msra.mxu0 0.0
    %360 = vmatprep.subr.mxu0 0.0
    %361 = vmatpush1.msra.mxu0 0.0
    %362 = vmatprep.subr.mxu0 0.0
    %363 = vmatpush1.msra.mxu0 0.0
    %364 = vmatprep.subr.mxu0 0.0
    %365 = vmatpush1.msra.mxu0 0.0
    %366 = vmatprep.subr.mxu0 0.0
    %367 = vmatpush1.msra.mxu0 0.0
    %368 = vmatprep.mubr.f32.mxu0 0.0
    %369 = vmatmul.mubr.f32.gmra.mrb[0].mxu0 %v302
    %v370 = vpop.f32.mrb[0].mxu0
    %v371 = vadd.f32 %v298, %v370
    %v372 = vpop.f32.mrb[0].mxu0
    %373 = vdwg.mxu0
    %vm374 = vcmask 15360
    %375 = vst.msk [vmem:[#allocation14] sm:$0xff] %vm374, %v371
    // Predicated region
    $region58: #{emission_predictor.1} parent=1 // pred_check
      _
    $region59: #{emission_predictor.1} parent=1 // pred_check_branch
      %377 = sbr.rel (0) target = $region61
    $region60: #{emission_predictor.1} parent=1 // pred_region
      %s379 = ssub.s32 128, 128
      %380 = vsyncadd [#allocation4], %s379
      %s382 = sshll.u32 [#allocation14], 4
      %s383 = int_to_ptr.vmem [resolvable:$true] %s382
      %385 = dma.vmem_to_hbm [thread:$0]  %s383, 128, %s7, [#allocation4]
    $region61: #{emission_predictor.1} parent=1 // pred_fallthru
      _
    // Predicated region
    $region62: #{emission_predictor.1} parent=1 // pred_check
      _
    $region63: #{emission_predictor.1} parent=1 // pred_check_branch
      %387 = sbr.rel (0) target = $region65
    $region64: #{emission_predictor.1} parent=1 // pred_region
      %388 = dma.done [#allocation4], 128
    $region65: #{emission_predictor.1} parent=1 // pred_fallthru
      _
    %389 = vsyncpa [#allocation3], 1
    %390 = vsyncpa [#allocation6], 1
    %391 = vsyncpa [#allocation9], 1
    %392 = vsyncpa [#allocation12], 1
    %393 = vsyncpa [#allocation4], 1

</llo_original>
